<compile_context>
chip_gen: v6e
topology: v6e:2x2x1
jax: 0.10.0
libtpu: 0.0.40
codegen_flags: <defaults>
</compile_context>

<pallas_src>
import functools

import numpy as np
import jax
import jax.numpy as jnp
from jax import lax
from jax.experimental import pallas as pl
from jax.experimental.pallas import tpu as pltpu

_NEG_INF = -1e30   # finite masked logit: fully-masked rows give a uniform
                   # average of V instead of the reference's NaN (documented).


def _vmem_capacity_bytes():
    try:
        info = pltpu.get_tpu_info()
        cap = getattr(info, "vmem_capacity_bytes", None)
        if cap:
            return int(cap)
    except Exception:
        pass
    return 128 * 1024 * 1024


def _vmem_limit_bytes():
    cap = _vmem_capacity_bytes()
    # ~40 MiB on v7x (64 MiB/TC physical), up to ~96 MiB on v5e/v6e (128 MiB).
    return min(int(cap * 0.65), 96 * 1024 * 1024)


def _choose_tile(dim, target, align):
    """Largest tile <= target that is a multiple of `align` and divides `dim`,
    falling back to the full dimension (always a legal BlockSpec block)."""
    if dim <= target:
        return dim
    t = (target // align) * align
    while t >= align:
        if dim % t == 0:
            return t
        t -= align
    return dim


# ------------------------------ tiled linear ------------------------------- #
def _linear_kernel(x_ref, w_ref, o_ref, acc_ref):
    @pl.when(pl.program_id(2) == 0)
    def _():
        acc_ref[...] = jnp.zeros_like(acc_ref)

    acc_ref[...] += jnp.dot(x_ref[...], w_ref[...],
                            preferred_element_type=jnp.float32)

    @pl.when(pl.program_id(2) == pl.num_programs(2) - 1)
    def _():
        o_ref[...] = acc_ref[...].astype(o_ref.dtype)


def _linear_bias_kernel(x_ref, w_ref, b_ref, o_ref, acc_ref):
    @pl.when(pl.program_id(2) == 0)
    def _():
        acc_ref[...] = jnp.zeros_like(acc_ref)

    acc_ref[...] += jnp.dot(x_ref[...], w_ref[...],
                            preferred_element_type=jnp.float32)

    @pl.when(pl.program_id(2) == pl.num_programs(2) - 1)
    def _():
        o_ref[...] = (acc_ref[...] + b_ref[...]).astype(o_ref.dtype)


def pallas_linear(x2d, w_t, bias=None, out_dtype=jnp.float32):
    """y = x2d @ w_t (+ bias).  w_t is (K, Nout) (transposed torch weight)."""
    M, K = x2d.shape
    Nout = w_t.shape[1]
    sub_align = 16 if jnp.dtype(x2d.dtype).itemsize == 2 else 8
    tm = _choose_tile(M, 512, sub_align)
    tn = _choose_tile(Nout, 512, 128)
    tk = _choose_tile(K, 1024, 128)
    grid = (M // tm, Nout // tn, K // tk)

    x_spec = pl.BlockSpec((tm, tk), lambda i, j, k: (i, k))
    w_spec = pl.BlockSpec((tk, tn), lambda i, j, k: (k, j))
    o_spec = pl.BlockSpec((tm, tn), lambda i, j, k: (i, j))
    cp = pltpu.CompilerParams(
        dimension_semantics=("parallel", "parallel", "arbitrary"),
        vmem_limit_bytes=_vmem_limit_bytes())

    if bias is None:
        return pl.pallas_call(
            _linear_kernel,
            out_shape=jax.ShapeDtypeStruct((M, Nout), out_dtype),
            grid=grid,
            in_specs=[x_spec, w_spec],
            out_specs=o_spec,
            scratch_shapes=[pltpu.VMEM((tm, tn), jnp.float32)],
            compiler_params=cp,
        )(x2d, w_t)

    b2d = bias.reshape(1, Nout).astype(jnp.float32)
    b_spec = pl.BlockSpec((1, tn), lambda i, j, k: (0, j))
    return pl.pallas_call(
        _linear_bias_kernel,
        out_shape=jax.ShapeDtypeStruct((M, Nout), out_dtype),
        grid=grid,
        in_specs=[x_spec, w_spec, b_spec],
        out_specs=o_spec,
        scratch_shapes=[pltpu.VMEM((tm, tn), jnp.float32)],
        compiler_params=cp,
    )(x2d, w_t, b2d)


# -------------------------- flash attention kernel ------------------------- #
def _flash_attn_kernel(*refs, H, hd, tq, tkv, mask_mode, eps, mxu_dtype,
                       lane_sliced, approx_recip):
    n_in = (3 if lane_sliced else 2) + 4 + (1 if mask_mode == "tensor" else 0)
    in_refs = refs[:n_in]
    o_ref = refs[n_in]
    m_scr, l_scr, acc_scr, qn_scr = refs[n_in + 1:]

    D = H * hd
    if lane_sliced:
        q_ref, k_ref, v_ref = in_refs[0:3]
        idx = 3
        k_base, v_base = 0, 0
    else:
        q_ref, kv_ref = in_refs[0:2]
        k_ref = v_ref = kv_ref
        idx = 2
        k_base, v_base = D, 2 * D
    qw_ref, qb_ref, kw_ref, kb_ref = in_refs[idx:idx + 4]
    mask_ref = in_refs[idx + 4] if mask_mode == "tensor" else None

    qi = pl.program_id(1)
    ki = pl.program_id(2)
    nk = pl.num_programs(2)

    def _layer_norm(t, w, b):
        t = t.astype(jnp.float32)
        mu = jnp.mean(t, axis=-1, keepdims=True)
        var = jnp.mean(jnp.square(t - mu), axis=-1, keepdims=True)
        return (t - mu) * lax.rsqrt(var + eps) * w + b

    @pl.when(ki == 0)
    def _init():
        m_scr[...] = jnp.full(m_scr.shape, -jnp.inf, m_scr.dtype)
        l_scr[...] = jnp.zeros(l_scr.shape, l_scr.dtype)
        acc_scr[...] = jnp.zeros(acc_scr.shape, acc_scr.dtype)
        # Hoisted q LayerNorm (scale pre-folded into qw/qb): computed once per
        # (b, qi) and reused for every kv block.
        q_all = q_ref[...]
        qw, qb = qw_ref[...], qb_ref[...]
        for h in range(H):
            q_h = q_all[:, h * hd:(h + 1) * hd]
            qn_scr[h] = _layer_norm(q_h, qw, qb).astype(qn_scr.dtype)

    def _compute(apply_causal_mask):
        kv_k = k_ref[...]
        kv_v = v_ref[...] if lane_sliced else kv_k
        kw, kb = kw_ref[...], kb_ref[...]

        if apply_causal_mask:
            row = qi * tq + lax.broadcasted_iota(jnp.int32, (tq, tkv), 0)
            col = ki * tkv + lax.broadcasted_iota(jnp.int32, (tq, tkv), 1)
            mask_add = jnp.where(col > row, _NEG_INF, 0.0).astype(jnp.float32)
        elif mask_mode == "tensor":
            mask_add = mask_ref[...].astype(jnp.float32) * _NEG_INF
        else:
            mask_add = None

        dims = (((1,), (1,)), ((), ()))          # contract head_dim, no .T
        for h in range(H):                       # static unroll over heads
            k_h = kv_k[:, k_base + h * hd:k_base + (h + 1) * hd]   # (tkv, hd)
            v_h = kv_v[:, v_base + h * hd:v_base + (h + 1) * hd]   # (tkv, hd)

            qn = qn_scr[h]                                         # (tq, hd)
            kn = _layer_norm(k_h, kw, kb).astype(mxu_dtype)

            s = lax.dot_general(qn, kn, dims,
                                preferred_element_type=jnp.float32)  # (tq,tkv)
            if mask_add is not None:
                s = s + mask_add

            m_prev = m_scr[h]                                      # (tq, 128)
            l_prev = l_scr[h]
            m_new = jnp.maximum(m_prev, jnp.max(s, axis=-1, keepdims=True))
            alpha = jnp.exp(m_prev - m_new)                        # lanes equal
            p = jnp.exp(s - m_new[:, :1])
            l_scr[h] = alpha * l_prev + jnp.sum(p, axis=-1, keepdims=True)
            acc_scr[h] = alpha[:, :1] * acc_scr[h] + jnp.dot(
                p.astype(mxu_dtype), v_h, preferred_element_type=jnp.float32)
            m_scr[h] = m_new

    if mask_mode == "causal":
        last_row = qi * tq + tq - 1

        @pl.when(ki * tkv <= last_row)           # skip fully-masked kv blocks
        def _():
            needs_mask = ki * tkv + tkv - 1 > qi * tq

            @pl.when(needs_mask)                 # diagonal block: build mask
            def _():
                _compute(True)

            @pl.when(jnp.logical_not(needs_mask))  # strictly below: no mask
            def _():
                _compute(False)
    else:
        _compute(False)

    @pl.when(ki == nk - 1)
    def _finalize():
        outs = []
        for h in range(H):
            inv_l = pl.reciprocal(l_scr[h][:, :1], approx=approx_recip)
            outs.append((acc_scr[h] * inv_l).astype(o_ref.dtype))
        o_ref[...] = jnp.concatenate(outs, axis=-1)   # lane-dense (tq, D) store


def pallas_flash_attention(qkv, q_w, q_b, k_w, k_b, attn_mask_i8, *,
                           num_heads, head_dim, mask_mode, mxu_dtype,
                           eps=1e-5, out_dtype=jnp.float32,
                           tq=None, tkv=None):
    """qkv: (N, L, 3D) with lanes ordered [q heads | k heads | v heads]."""
    N, L, threeD = qkv.shape
    H, hd = num_heads, head_dim
    D = H * hd
    assert threeD == 3 * D

    sub_align = 16 if jnp.dtype(mxu_dtype).itemsize == 2 else 8
    vmem_cap = _vmem_capacity_bytes()
    tile_target = 512 if vmem_cap >= (100 << 20) else 256   # smaller on v7x
    if tq is None:
        tq = _choose_tile(L, tile_target, sub_align)
    if tkv is None:
        tkv = _choose_tile(L, tile_target, 128)
    assert L % tq == 0 and L % tkv == 0
    grid = (N, L // tq, L // tkv)

    # q/k/v lane-sliced specs need last-dim blocks of width D (multiple of 128).
    lane_sliced = (D % 128 == 0)

    if mask_mode == "causal":
        # Above-diagonal kv blocks alias the last valid block -> consecutive
        # identical block indices are dedup'd, so their DMA is skipped too.
        def kv_block(i, j):
            return jnp.minimum(j, (i * tq + tq - 1) // tkv)
    else:
        def kv_block(i, j):
            return j

    if lane_sliced:
        in_specs = [
            pl.BlockSpec((None, tq, D), lambda b, i, j: (b, i, 0)),
            pl.BlockSpec((None, tkv, D), lambda b, i, j: (b, kv_block(i, j), 1)),
            pl.BlockSpec((None, tkv, D), lambda b, i, j: (b, kv_block(i, j), 2)),
        ]
        args = [qkv, qkv, qkv]
    else:
        # small-D fallback: fused 3D-wide blocks (test-size shapes)
        in_specs = [
            pl.BlockSpec((None, tq, 3 * D), lambda b, i, j: (b, i, 0)),
            pl.BlockSpec((None, tkv, 3 * D), lambda b, i, j: (b, kv_block(i, j), 0)),
        ]
        args = [qkv, qkv]

    ln_spec = pl.BlockSpec((1, hd), lambda b, i, j: (0, 0))
    in_specs += [ln_spec] * 4
    args += [q_w.reshape(1, hd).astype(jnp.float32),
             q_b.reshape(1, hd).astype(jnp.float32),
             k_w.reshape(1, hd).astype(jnp.float32),
             k_b.reshape(1, hd).astype(jnp.float32)]
    if mask_mode == "tensor":
        # TODO(synk): only a shared (L, L) mask is supported; per-batch/head
        # masks would need a batch-indexed mask BlockSpec.
        in_specs.append(pl.BlockSpec((tq, tkv), lambda b, i, j: (i, j)))
        args.append(attn_mask_i8)

    kern = functools.partial(
        _flash_attn_kernel, H=H, hd=hd, tq=tq, tkv=tkv, mask_mode=mask_mode,
        eps=eps, mxu_dtype=mxu_dtype, lane_sliced=lane_sliced,
        approx_recip=(jnp.dtype(mxu_dtype) == jnp.dtype(jnp.bfloat16)))

    out_spec = pl.BlockSpec((None, tq, D), lambda b, i, j: (b, i, 0))
    scratch = [pltpu.VMEM((H, tq, 128), jnp.float32),   # running max (lane-dense)
               pltpu.VMEM((H, tq, 128), jnp.float32),   # running sum (lane-dense)
               pltpu.VMEM((H, tq, hd), jnp.float32),    # output accumulator
               pltpu.VMEM((H, tq, hd), mxu_dtype)]      # hoisted normalized q

    return pl.pallas_call(
        kern,
        out_shape=jax.ShapeDtypeStruct((N, L, D), out_dtype),
        grid=grid,
        in_specs=in_specs,
        out_specs=out_spec,
        scratch_shapes=scratch,
        compiler_params=pltpu.CompilerParams(
            dimension_semantics=("parallel", "parallel", "arbitrary"),
            vmem_limit_bytes=_vmem_limit_bytes()),
    )(*args)


# -------------------------------- forward ---------------------------------- #
def generalized_causal_attention(x, params, attn_mask=None, *, is_causal=False,
                                 mxu_dtype=jnp.float32, eps=1e-5,
                                 tq=None, tkv=None):
    """Pallas replica of GeneralizedCausalAttention._forward.

    attn_mask: optional (L, L) boolean mask, True = disallowed (torch semantics).
    is_causal: generate the causal mask in-kernel (no (L,L) HBM mask traffic);
               attn_mask is ignored in that case.
    mxu_dtype: dtype for MXU operands / intermediate activations (bf16 for
               production, f32 for tight numerical checks).  In bf16 mode the
               LayerNorm statistics are computed from bf16-quantized qkv
               activations (precision loss vs. the f32 reference, covered by
               the loosened tolerance).
    """
    N, L, D = x.shape
    H = params["num_heads"]
    hd = D // H
    scale = hd ** -0.5
    cdt = mxu_dtype

    # QKV projection: (N*L, D) @ (D, 3D), no bias.
    qkv = pallas_linear(x.reshape(N * L, D).astype(cdt),
                        params["qkv_w"].T.astype(cdt),
                        bias=None, out_dtype=cdt)
    qkv = qkv.reshape(N, L, 3 * D)          # lanes: [q_h0.. | k_h0.. | v_h0..]

    if is_causal:
        mask_mode, mask_i8 = "causal", None
    elif attn_mask is not None:
        mask_mode = "tensor"
        mask_i8 = jnp.broadcast_to(attn_mask, (L, L)).astype(jnp.int8)
    else:
        mask_mode, mask_i8 = "none", None

    # Attention, lane-dense (N, L, D) output (scale folded into q-norm w/b).
    o = pallas_flash_attention(
        qkv,
        params["q_norm_w"] * scale, params["q_norm_b"] * scale,
        params["k_norm_w"], params["k_norm_b"],
        mask_i8,
        num_heads=H, head_dim=hd, mask_mode=mask_mode,
        mxu_dtype=cdt, eps=eps, out_dtype=cdt, tq=tq, tkv=tkv)

    # Output projection.
    out = pallas_linear(o.reshape(N * L, D),
                        params["proj_w"].T.astype(cdt),
                        bias=params["proj_b"], out_dtype=jnp.float32)
    return out.reshape(N, L, D)

    # TODO(synk): _forward_kv_cache (decode-time KV concat/update) not implemented.


# ----------------------------- pure-JAX reference --------------------------- #
def reference_forward(x, params, attn_mask=None, eps=1e-5):
    N, L, D = x.shape
    H = params["num_heads"]
    hd = D // H
    scale = hd ** -0.5

    def ln(t, w, b):
        mu = jnp.mean(t, axis=-1, keepdims=True)
        var = jnp.mean((t - mu) ** 2, axis=-1, keepdims=True)
        return (t - mu) / jnp.sqrt(var + eps) * w + b

    qkv = x @ params["qkv_w"].T
    qkv = qkv.reshape(N, L, 3, H, hd).transpose(2, 0, 3, 1, 4)
    q, k, v = qkv[0], qkv[1], qkv[2]
    q = ln(q, params["q_norm_w"], params["q_norm_b"]) * scale
    k = ln(k, params["k_norm_w"], params["k_norm_b"])
    attn = jnp.einsum("nhqd,nhkd->nhqk", q, k)
    if attn_mask is not None:
        attn = attn + jnp.where(attn_mask, -jnp.inf, 0.0)
    attn = jax.nn.softmax(attn, axis=-1)
    o = jnp.einsum("nhqk,nhkd->nhqd", attn, v)
    o = o.transpose(0, 2, 1, 3).reshape(N, L, D)
    return o @ params["proj_w"].T + params["proj_b"]


# ---------------------------------- main ------------------------------------ #
if __name__ == "__main__":
    def _make_params(key, D, H):
        k1, k2, k3, k4, k5, k6, k7 = jax.random.split(key, 7)
        hd = D // H
        return {
            "num_heads": H,
            "qkv_w": 0.05 * jax.random.normal(k1, (3 * D, D), jnp.float32),
            "proj_w": 0.05 * jax.random.normal(k2, (D, D), jnp.float32),
            "proj_b": 0.05 * jax.random.normal(k3, (D,), jnp.float32),
            "q_norm_w": 1.0 + 0.05 * jax.random.normal(k4, (hd,), jnp.float32),
            "q_norm_b": 0.05 * jax.random.normal(k5, (hd,), jnp.float32),
            "k_norm_w": 1.0 + 0.05 * jax.random.normal(k6, (hd,), jnp.float32),
            "k_norm_b": 0.05 * jax.random.normal(k7, (hd,), jnp.float32),
        }

    # ---- small config (D=32): exercises the fused-qkv fallback specs ------- #
    N, L, D, H = 2, 8, 32, 4
    params = _make_params(jax.random.PRNGKey(0), D, H)
    x = jax.random.normal(jax.random.PRNGKey(42), (N, L, D), jnp.float32)
    causal_mask = jnp.triu(jnp.ones((L, L), dtype=bool), k=1)

    out = jax.block_until_ready(generalized_causal_attention(
        x, params, is_causal=True, mxu_dtype=jnp.float32))
    ref = reference_forward(x, params, causal_mask)
    np.testing.assert_allclose(np.asarray(out), np.asarray(ref),
                               atol=2e-3, rtol=2e-3)

    rand_mask = jax.random.bernoulli(jax.random.PRNGKey(7), 0.3, (L, L))
    rand_mask = rand_mask & (~jnp.eye(L, dtype=bool))   # keep diagonal attendable
    out_m = jax.block_until_ready(generalized_causal_attention(
        x, params, attn_mask=rand_mask, mxu_dtype=jnp.float32))
    np.testing.assert_allclose(
        np.asarray(out_m), np.asarray(reference_forward(x, params, rand_mask)),
        atol=2e-3, rtol=2e-3)

    out_n = jax.block_until_ready(generalized_causal_attention(
        x, params, None, mxu_dtype=jnp.float32))
    np.testing.assert_allclose(
        np.asarray(out_n), np.asarray(reference_forward(x, params, None)),
        atol=2e-3, rtol=2e-3)

    out_bf = jax.block_until_ready(generalized_causal_attention(
        x, params, is_causal=True, mxu_dtype=jnp.bfloat16))
    np.testing.assert_allclose(np.asarray(out_bf), np.asarray(ref),
                               atol=5e-2, rtol=5e-2)

    # ---- medium config (D=128): lane-sliced q/k/v specs, multi-block online
    #      softmax, causal kv-DMA dedup, diagonal-only masking --------------- #
    N2, L2, D2, H2 = 2, 256, 128, 4
    params2 = _make_params(jax.random.PRNGKey(1), D2, H2)
    x2 = jax.random.normal(jax.random.PRNGKey(43), (N2, L2, D2), jnp.float32)
    causal_mask2 = jnp.triu(jnp.ones((L2, L2), dtype=bool), k=1)

    out2 = jax.block_until_ready(generalized_causal_attention(
        x2, params2, is_causal=True, mxu_dtype=jnp.float32, tq=128, tkv=128))
    ref2 = reference_forward(x2, params2, causal_mask2)
    np.testing.assert_allclose(np.asarray(out2), np.asarray(ref2),
                               atol=2e-3, rtol=2e-3)

    rand_mask2 = jax.random.bernoulli(jax.random.PRNGKey(9), 0.3, (L2, L2))
    rand_mask2 = rand_mask2 & (~jnp.eye(L2, dtype=bool))
    out2_m = jax.block_until_ready(generalized_causal_attention(
        x2, params2, attn_mask=rand_mask2, mxu_dtype=jnp.float32,
        tq=128, tkv=128))
    np.testing.assert_allclose(
        np.asarray(out2_m),
        np.asarray(reference_forward(x2, params2, rand_mask2)),
        atol=2e-3, rtol=2e-3)

    out2_bf = jax.block_until_ready(generalized_causal_attention(
        x2, params2, is_causal=True, mxu_dtype=jnp.bfloat16, tq=128, tkv=128))
    np.testing.assert_allclose(np.asarray(out2_bf), np.asarray(ref2),
                               atol=1e-1, rtol=1e-1)

    print("KERNEL_OK")
</pallas_src>

<mosaic_0001>
module attributes {stable_mosaic.version = 11 : i64} {
  func.func @_linear_kernel(%arg0: i32, %arg1: i32, %arg2: i32, %arg3: memref<16x32xf32, #tpu.memory_space<vmem>>, %arg4: memref<32x96xf32, #tpu.memory_space<vmem>>, %arg5: memref<16x96xf32, #tpu.memory_space<vmem>>, %arg6: memref<16x96xf32, #tpu.memory_space<vmem>>) attributes {dimension_semantics = [#tpu.dimension_semantics<parallel>, #tpu.dimension_semantics<parallel>, #tpu.dimension_semantics<arbitrary>], iteration_bounds = array<i64: 1, 1, 1>, scalar_prefetch = 0 : i64, scratch_operands = 1 : i64, tpu.core_type = #tpu.core_type<tc>, window_params = [{transform_indices = @transform_0, window_bounds = array<i64: 16, 32>}, {transform_indices = @transform_1, window_bounds = array<i64: 32, 96>}, {transform_indices = @transform_2, window_bounds = array<i64: 16, 96>}]} {
    %c0_i32 = arith.constant 0 : i32
    %0 = arith.cmpi eq, %arg2, %c0_i32 : i32
    %1 = arith.extui %0 : i1 to i32
    %c0_i32_0 = arith.constant 0 : i32
    %2 = arith.cmpi ne, %1, %c0_i32_0 : i32
    scf.if %2 {
      %cst_10 = arith.constant 0.000000e+00 : f32
      %12 = vector.broadcast %cst_10 : f32 to vector<16x96xf32>
      %c0_11 = arith.constant 0 : index
      %c0_12 = arith.constant 0 : index
      %13 = vector.load %arg6[%c0_11, %c0_12] : memref<16x96xf32, #tpu.memory_space<vmem>>, vector<16x96xf32>
      tpu.vector_store %arg6[%c0_11, %c0_12], %12 {strides = array<i32>} : memref<16x96xf32, #tpu.memory_space<vmem>>, vector<16x96xf32>,
    } else {
    }
    %c0 = arith.constant 0 : index
    %c0_1 = arith.constant 0 : index
    %3 = vector.load %arg6[%c0, %c0_1] : memref<16x96xf32, #tpu.memory_space<vmem>>, vector<16x96xf32>
    %c0_2 = arith.constant 0 : index
    %c0_3 = arith.constant 0 : index
    %4 = vector.load %arg3[%c0_2, %c0_3] : memref<16x32xf32, #tpu.memory_space<vmem>>, vector<16x32xf32>
    %c0_4 = arith.constant 0 : index
    %c0_5 = arith.constant 0 : index
    %5 = vector.load %arg4[%c0_4, %c0_5] : memref<32x96xf32, #tpu.memory_space<vmem>>, vector<32x96xf32>
    %cst = arith.constant dense<0.000000e+00> : vector<16x96xf32>
    %6 = tpu.matmul %4, %5, %cst {dimension_numbers = #tpu.dot_dimension_numbers<[1], [0], [0], [1], [0, 0, 1, 1], [], []>} : vector<16x32xf32>, vector<32x96xf32>, vector<16x96xf32> -> vector<16x96xf32>
    %7 = arith.addf %3, %6 : vector<16x96xf32>
    %c0_6 = arith.constant 0 : index
    %c0_7 = arith.constant 0 : index
    %8 = vector.load %arg6[%c0_6, %c0_7] : memref<16x96xf32, #tpu.memory_space<vmem>>, vector<16x96xf32>
    tpu.vector_store %arg6[%c0_6, %c0_7], %7 {strides = array<i32>} : memref<16x96xf32, #tpu.memory_space<vmem>>, vector<16x96xf32>,
    %c0_i32_8 = arith.constant 0 : i32
    %9 = arith.cmpi eq, %arg2, %c0_i32_8 : i32
    %10 = arith.extui %9 : i1 to i32
    %c0_i32_9 = arith.constant 0 : i32
    %11 = arith.cmpi ne, %10, %c0_i32_9 : i32
    scf.if %11 {
      %c0_10 = arith.constant 0 : index
      %c0_11 = arith.constant 0 : index
      %12 = vector.load %arg6[%c0_10, %c0_11] : memref<16x96xf32, #tpu.memory_space<vmem>>, vector<16x96xf32>
      %c0_12 = arith.constant 0 : index
      %c0_13 = arith.constant 0 : index
      %13 = vector.load %arg5[%c0_12, %c0_13] : memref<16x96xf32, #tpu.memory_space<vmem>>, vector<16x96xf32>
      tpu.vector_store %arg5[%c0_12, %c0_13], %12 {strides = array<i32>} : memref<16x96xf32, #tpu.memory_space<vmem>>, vector<16x96xf32>,
    } else {
    }
    return
  }
  func.func @transform_0(%arg0: i32, %arg1: i32, %arg2: i32) -> (i32, i32) {
    %c0_i32 = arith.constant 0 : i32
    return %arg0, %arg2 : i32, i32
  }
  func.func @transform_1(%arg0: i32, %arg1: i32, %arg2: i32) -> (i32, i32) {
    %c0_i32 = arith.constant 0 : i32
    return %arg2, %arg1 : i32, i32
  }
  func.func @transform_2(%arg0: i32, %arg1: i32, %arg2: i32) -> (i32, i32) {
    %c0_i32 = arith.constant 0 : i32
    return %arg0, %arg1 : i32, i32
  }
}

</mosaic_0001>

<llo_original>
// kernel: tpu_custom_call.1
$region0: #{tpu_custom_call.1}
  #allocation0 [shape = 'u32[]', space=smem, size = 0x4, offset = 0x4, fixed_abs, tag = 'smem constant byte address 0x4 - core index']
  #allocation1 [shape = 'u32[144,128]{1,0:T(1,128)}', space=vmem, size = 0x12000, scoped, tag = 'internal scratch']
  #allocation2 [shape = 'f32[16,96]{1,0:T(8,128)}', space=vmem, size = 0x2000, scoped, tag = 'scratch operand']
  %s0 = inlined_call_operand.hbm [shape: f32[16,32], index: 0, kind: input, shape index: {}]
  %s1 = inlined_call_operand.hbm [shape: f32[32,96], index: 1, kind: input, shape index: {}]
  %s2 = inlined_call_operand.hbm [shape: f32[16,96], index: 2, kind: output, shape index: {}]
  %s3 = sld [smem:[#allocation0]]
  $region34: #{tpu_custom_call.1} parent=0
    _
  %s5 = ssub.s32 1, %s3
  %s6 = scalar_select 0, %s5, %s3
  $region1: #{tpu_custom_call.1} parent=0
    #allocation3 [shape = 'u8[8192]{0}', space=vmem, size = 0x2000, scoped, tag = 'input window, operand 0, single buffered']
    #allocation4 [shape = 's32[1]{0}', space=sflag, size = 0x4, scoped, tag = 'scoped memory for tpu_custom_call.1']
    #allocation5 [shape = 's32[1]{0}', space=sflag, size = 0x4, scoped, tag = 'scoped memory for tpu_custom_call.1']
    #allocation6 [shape = 'u8[16384]{0}', space=vmem, size = 0x4000, scoped, tag = 'input window, operand 1, single buffered']
    #allocation7 [shape = 's32[1]{0}', space=sflag, size = 0x4, scoped, tag = 'scoped memory for tpu_custom_call.1']
    #allocation8 [shape = 'u8[8192]{0}', space=vmem, size = 0x2000, scoped, tag = 'output window, operand 0, single buffered']
    %7 = vsyncpa [#allocation4], 0
    %8 = vsyncpa [#allocation7], 0
    %9 = vsyncpa [#allocation5], 0
    // Predicated region
    $region2: #{tpu_custom_call.1} parent=1 // pred_check
      _
    $region3: #{tpu_custom_call.1} parent=1 // pred_check_branch
      %11 = sbr.rel (0) target = $region5
    $region4: #{tpu_custom_call.1} parent=1 // pred_region
      %s13 = ssub.s32 256, 256
      %14 = vsyncadd [#allocation4], %s13
      %s15 = sshll.u32 [#allocation3], 4
      %s16 = int_to_ptr.vmem [resolvable:$true] %s15
      %21 = dma.hbm_to_vmem [thread:$0]  %s0, 256, %s16, [#allocation4], 128, 128, 8
    $region5: #{tpu_custom_call.1} parent=1 // pred_fallthru
      _
    // Predicated region
    $region6: #{tpu_custom_call.1} parent=1 // pred_check
      _
    $region7: #{tpu_custom_call.1} parent=1 // pred_check_branch
      %23 = sbr.rel (0) target = $region9
    $region8: #{tpu_custom_call.1} parent=1 // pred_region
      %s25 = ssub.s32 512, 512
      %26 = vsyncadd [#allocation7], %s25
      %s27 = sshll.u32 [#allocation6], 4
      %s28 = int_to_ptr.vmem [resolvable:$true] %s27
      %33 = dma.hbm_to_vmem [thread:$0]  %s1, 512, %s28, [#allocation7], 128, 128, 8
    $region9: #{tpu_custom_call.1} parent=1 // pred_fallthru
      _
    // Predicated region
    $region10: #{tpu_custom_call.1} parent=1 // pred_check
      _
    $region11: #{tpu_custom_call.1} parent=1 // pred_check_branch
      %35 = sbr.rel (0) target = $region13
    $region12: #{tpu_custom_call.1} parent=1 // pred_region
      %36 = dma.done [#allocation4], 256
    $region13: #{tpu_custom_call.1} parent=1 // pred_fallthru
      _
    // Predicated region
    $region14: #{tpu_custom_call.1} parent=1 // pred_check
      _
    $region15: #{tpu_custom_call.1} parent=1 // pred_check_branch
      %38 = sbr.rel (0) target = $region17
    $region16: #{tpu_custom_call.1} parent=1 // pred_region
      %39 = dma.done [#allocation7], 512
    $region17: #{tpu_custom_call.1} parent=1 // pred_fallthru
      _
    %p40 = scmp.eq.s32.totalorder 0, 0
    // Predicated region
    $region18: #{tpu_custom_call.1} parent=1 // pred_check
      %p41 = pneg %p40
    $region19: #{tpu_custom_call.1} parent=1 // pred_check_branch
      %43 = sbr.rel (%p41) target = $region21
    $region20: #{tpu_custom_call.1} parent=1 // pred_region
      %vm44 = vcmask 785408
      %45 = vst.msk [vmem:[#allocation2] sm:$0xff] %vm44, 0.0
      %46 = vst.msk [vmem:[#allocation2 + $0x8] sm:$0xff] %vm44, 0.0
    $region21: #{tpu_custom_call.1} parent=1 // pred_fallthru
      _
    %v47 = vld [vmem:[#allocation2] sm:$0xff]
    %v48 = vld [vmem:[#allocation2 + $0x8] sm:$0xff]
    %v49 = vld [vmem:[#allocation3] sm:$0xff]
    %v50 = vld [vmem:[#allocation3 + $0x8] sm:$0xff]
    %v51 = vld [vmem:[#allocation6] sm:$0xff]
    %v52 = vld [vmem:[#allocation6 + $0x8] sm:$0xff]
    %v53 = vld [vmem:[#allocation6 + $0x10] sm:$0xff]
    %v54 = vld [vmem:[#allocation6 + $0x18] sm:$0xff]
    %vm55 = vcmask 261120
    %v57 = vsel %vm55, %v49, 0
    %v60 = vsel %vm55, %v50, 0
    %62 = vmatprep.subr.mxu0 0.0
    %63 = vmatpush1.msra.mxu0 0.0
    %64 = vmatprep.subr.mxu0 0.0
    %65 = vmatpush1.msra.mxu0 0.0
    %66 = vmatprep.subr.mxu0 0.0
    %67 = vmatpush1.msra.mxu0 0.0
    %68 = vmatprep.subr.mxu0 0.0
    %69 = vmatpush1.msra.mxu0 0.0
    %70 = vmatprep.subr.mxu0 0.0
    %71 = vmatpush1.msra.mxu0 0.0
    %72 = vmatprep.subr.mxu0 0.0
    %73 = vmatpush1.msra.mxu0 0.0
    %74 = vmatprep.subr.mxu0 0.0
    %75 = vmatpush1.msra.mxu0 0.0
    %76 = vmatprep.subr.mxu0 0.0
    %77 = vmatpush1.msra.mxu0 0.0
    %78 = vmatprep.subr.mxu0 0.0
    %79 = vmatpush1.msra.mxu0 0.0
    %80 = vmatprep.subr.mxu0 0.0
    %81 = vmatpush1.msra.mxu0 0.0
    %82 = vmatprep.subr.mxu0 0.0
    %83 = vmatpush1.msra.mxu0 0.0
    %84 = vmatprep.subr.mxu0 0.0
    %85 = vmatpush1.msra.mxu0 0.0
    %86 = vmatprep.subr.mxu0 0.0
    %87 = vmatpush1.msra.mxu0 %v54
    %88 = vmatprep.subr.mxu0 0.0
    %89 = vmatpush1.msra.mxu0 %v53
    %90 = vmatprep.subr.mxu0 0.0
    %91 = vmatpush1.msra.mxu0 %v52
    %92 = vmatprep.subr.mxu0 0.0
    %93 = vmatpush1.msra.mxu0 %v51
    %94 = vmatprep.subr.mxu0 0.0
    %95 = vmatpush2.msra.mxu0 0.0
    %96 = vmatprep.subr.mxu0 0.0
    %97 = vmatpush2.msra.mxu0 0.0
    %98 = vmatprep.subr.mxu0 0.0
    %99 = vmatpush2.msra.mxu0 0.0
    %100 = vmatprep.subr.mxu0 0.0
    %101 = vmatpush2.msra.mxu0 0.0
    %102 = vmatprep.subr.mxu0 0.0
    %103 = vmatpush2.msra.mxu0 0.0
    %104 = vmatprep.subr.mxu0 0.0
    %105 = vmatpush2.msra.mxu0 0.0
    %106 = vmatprep.subr.mxu0 0.0
    %107 = vmatpush2.msra.mxu0 0.0
    %108 = vmatprep.subr.mxu0 0.0
    %109 = vmatpush2.msra.mxu0 0.0
    %110 = vmatprep.subr.mxu0 0.0
    %111 = vmatpush2.msra.mxu0 0.0
    %112 = vmatprep.subr.mxu0 0.0
    %113 = vmatpush2.msra.mxu0 0.0
    %114 = vmatprep.subr.mxu0 0.0
    %115 = vmatpush2.msra.mxu0 0.0
    %116 = vmatprep.subr.mxu0 0.0
    %117 = vmatpush2.msra.mxu0 0.0
    %118 = vmatprep.subr.mxu0 0.0
    %119 = vmatpush2.msra.mxu0 0.0
    %120 = vmatprep.subr.mxu0 0.0
    %121 = vmatpush2.msra.mxu0 0.0
    %122 = vmatprep.subr.mxu0 0.0
    %123 = vmatpush2.msra.mxu0 0.0
    %124 = vmatprep.subr.mxu0 0.0
    %125 = vmatpush2.msra.mxu0 0.0
    %126 = vmatprep.mubr.f32.mxu0 0.0
    %127 = vmatmul.mubr.f32.gmra.mxu0 %v57
    %v128 = vpop.f32.mrf.mxu0
    %v129 = vadd.f32 0.0, %v128
    %v130 = vpop.f32.mrf.mxu0
    %131 = vmatprep.mubr.f32.mxu0 0.0
    %132 = vmatmul.mubr.f32.gmra.mxu0 %v60
    %v133 = vpop.f32.mrf.mxu0
    %v134 = vadd.f32 0.0, %v133
    %v135 = vpop.f32.mrf.mxu0
    %136 = vdwg.mxu0
    %v137 = vadd.f32 %v47, %v129
    %v138 = vadd.f32 %v48, %v134
    %vm139 = vcmask 785408
    %140 = vst.msk [vmem:[#allocation2] sm:$0xff] %vm139, %v137
    %141 = vst.msk [vmem:[#allocation2 + $0x8] sm:$0xff] %vm139, %v138
    // Predicated region
    $region22: #{tpu_custom_call.1} parent=1 // pred_check
      %p142 = pneg %p40
    $region23: #{tpu_custom_call.1} parent=1 // pred_check_branch
      %144 = sbr.rel (%p142) target = $region25
    $region24: #{tpu_custom_call.1} parent=1 // pred_region
      %v145 = vld [vmem:[#allocation2] sm:$0xff]
      %v146 = vld [vmem:[#allocation2 + $0x8] sm:$0xff]
      %147 = vst.msk [vmem:[#allocation8] sm:$0xff] %vm139, %v145
      %148 = vst.msk [vmem:[#allocation8 + $0x8] sm:$0xff] %vm139, %v146
    $region25: #{tpu_custom_call.1} parent=1 // pred_fallthru
      _
    // Predicated region
    $region26: #{tpu_custom_call.1} parent=1 // pred_check
      _
    $region27: #{tpu_custom_call.1} parent=1 // pred_check_branch
      %150 = sbr.rel (0) target = $region29
    $region28: #{tpu_custom_call.1} parent=1 // pred_region
      %s152 = ssub.s32 256, 256
      %153 = vsyncadd [#allocation5], %s152
      %s154 = sshll.u32 [#allocation8], 4
      %s155 = int_to_ptr.vmem [resolvable:$true] %s154
      %160 = dma.vmem_to_hbm [thread:$0]  %s155, 256, %s2, [#allocation5], 128, 128, 8
    $region29: #{tpu_custom_call.1} parent=1 // pred_fallthru
      _
    // Predicated region
    $region30: #{tpu_custom_call.1} parent=1 // pred_check
      _
    $region31: #{tpu_custom_call.1} parent=1 // pred_check_branch
      %162 = sbr.rel (0) target = $region33
    $region32: #{tpu_custom_call.1} parent=1 // pred_region
      %163 = dma.done [#allocation5], 256
    $region33: #{tpu_custom_call.1} parent=1 // pred_fallthru
      _
    %164 = vsyncpa [#allocation4], 1
    %165 = vsyncpa [#allocation7], 1
    %166 = vsyncpa [#allocation5], 1

</llo_original>
